<compile_context>
chip_gen: v7x
topology: tpu7x:2x2x1
jax: 0.10.0
libtpu: 0.0.40
codegen_flags: <defaults>
</compile_context>

<pallas_src>
import math
import functools

import jax
import jax.numpy as jnp
from jax.experimental import pallas as pl
from jax.experimental.pallas import tpu as pltpu


_LOW_PRECISION_MIN_C = 64  # gate the bf16 operand path (skip it at tiny C, esp. v5e)


def _sublane_multiple(dtype) -> int:
    itemsize = jnp.dtype(dtype).itemsize
    return {4: 8, 2: 16, 1: 32}.get(itemsize, 8)


def _pick_vmem_limit_bytes() -> int:
    # ~3/4 of physical VMEM, capped at 100 MiB: ~96 MiB on v5e/v6e, 48 MiB on v7x.
    try:
        cap = int(pltpu.get_tpu_info().vmem_capacity_bytes)
    except Exception:
        cap = 64 * 1024 * 1024
    return int(min(cap * 3 // 4, 100 * 1024 * 1024))


def _attn_kernel(x_ref, w_ref, o_ref, *, c, c_pad, block_b):
    # x_ref: (block_b, C, N) block of x in channel-major (C, N) layout
    # w_ref: (3*Cp, C) fused [Wq/sqrt(C); Wk; Wv], each row block zero-padded to Cp rows
    # o_ref: (block_b, C, N) output block, lane-dense along N
    w_qkv = w_ref[...]                                                     # (3Cp, C)

    def body(bb, carry):
        x_cn = x_ref[bb]                                                   # (C, N)

        # Fused Q/K/V projection: one MXU push per batch, f32 accumulation.
        qkv = jnp.dot(w_qkv, x_cn, preferred_element_type=jnp.float32)     # (3Cp, N)
        qkv = qkv.astype(x_cn.dtype)          # keep MXU operands in the compute dtype
        q_cn = qkv[0 * c_pad:1 * c_pad]       # (Cp, N) — sublane-aligned free views
        k_cn = qkv[1 * c_pad:2 * c_pad]
        v_cn = qkv[2 * c_pad:3 * c_pad]

        # Channel-attention scores: S[i, j] = sum_n Q[n, i] * K[n, j].
        # 1/sqrt(C) is already folded into the Wq rows; contract over the lane/N axis
        # directly (no transposes materialized).
        scores = jax.lax.dot_general(
            q_cn, k_cn, dimension_numbers=(((1,), (1,)), ((), ())),
            preferred_element_type=jnp.float32)                            # (Cp, Cp)

        if c_pad != c:
            # Zero-padded K rows create spurious score columns; mask them so they do
            # not inflate the softmax denominator.
            col = jax.lax.broadcasted_iota(jnp.int32, scores.shape, 1)
            scores = jnp.where(col < c, scores, -1e30)

        # Numerically stable softmax with normalization deferred past the A@V matmul.
        m = jnp.max(scores, axis=-1, keepdims=True)                        # (Cp, 1)
        p = jnp.exp(scores - m)                                            # (Cp, Cp)
        l = jnp.sum(p, axis=-1, keepdims=True)                             # (Cp, 1)

        out = jnp.dot(p.astype(v_cn.dtype), v_cn,
                      preferred_element_type=jnp.float32)                  # (Cp, N)

        # EUP approx reciprocal + one Newton step: ~f32 accuracy (well inside 1e-5),
        # cheaper than the exact divide path.
        r = pl.reciprocal(l, approx=True)
        r = r * (2.0 - l * r)
        out = out * r

        o_ref[bb] = out[:c].astype(o_ref.dtype)
        return carry

    # lax.fori_loop bounds live ranges (unlike a static Python unroll); fully unroll
    # tiny trip counts for LLO scheduler visibility.
    jax.lax.fori_loop(0, block_b, body, 0, unroll=block_b <= 2)


def single_head_self_attention(x, wq, wk, wv, *, block_b=None, compute_dtype=None):
    """x: (B, C, H, W); wq/wk/wv: (C, C) nn.Linear weights (out, in). Returns (B, C, H, W)."""
    B, C, H, W = x.shape
    N = H * W

    if block_b is None:
        # Biggest block per grid step (grid=1) on the single-TC v5e/v6e; keep >= 2
        # grid steps for larger even batches so v7x's 2 TCs can shard the batch axis.
        block_b = B // 2 if (B >= 4 and B % 2 == 0) else B
    if B % block_b != 0:
        raise ValueError(f"block_b={block_b} must divide B={B}")

    # bf16 MXU-operand path only pays off at production C (v5e has no bf16 VPU/EUP and
    # a K=C contraction at tiny C gains nothing); keep f32 end-to-end otherwise.
    use_low_precision = compute_dtype is not None and C >= _LOW_PRECISION_MIN_C
    kernel_dtype = jnp.dtype(compute_dtype) if use_low_precision else jnp.dtype(x.dtype)

    # Pad each Q/K/V row block of the fused weight to a sublane multiple so the
    # in-kernel slices are aligned, free views; fold 1/sqrt(C) into the Wq rows.
    sub = _sublane_multiple(kernel_dtype)
    c_pad = -(-C // sub) * sub
    scale = 1.0 / math.sqrt(C)

    def _pad_rows(w):
        return jnp.pad(w, ((0, c_pad - C), (0, 0)))

    w_qkv = jnp.concatenate(
        [_pad_rows(wq * scale), _pad_rows(wk), _pad_rows(wv)], axis=0)     # (3*Cp, C)

    # Free reshape: NCHW -> (B, C, N).  No whole-tensor input transpose.
    x_cn = x.reshape(B, C, N)
    if use_low_precision:
        x_cn = x_cn.astype(kernel_dtype)
        w_qkv = w_qkv.astype(kernel_dtype)

    kernel = functools.partial(_attn_kernel, c=C, c_pad=c_pad, block_b=block_b)

    out_cn = pl.pallas_call(
        kernel,
        out_shape=jax.ShapeDtypeStruct((B, C, N), x.dtype),
        grid_spec=pltpu.PrefetchScalarGridSpec(
            num_scalar_prefetch=0,
            grid=(B // block_b,),
            in_specs=[
                pl.BlockSpec((block_b, C, N), lambda b: (b, 0, 0)),
                pl.BlockSpec((3 * c_pad, C), lambda b: (0, 0)),
            ],
            out_specs=pl.BlockSpec((block_b, C, N), lambda b: (b, 0, 0)),
        ),
        compiler_params=pltpu.CompilerParams(
            dimension_semantics=("parallel",),
            vmem_limit_bytes=_pick_vmem_limit_bytes(),
        ),
    )(x_cn, w_qkv)

    # TODO(synk): for production C % 128 == 0, emit the output directly in (B, N, C)
    #   (contract V with P into lane-dense (N, C) tiles) and delete this transpose pass.
    # TODO(synk): for production N >= 4096 on v7x (64 MiB VMEM), add an inner
    #   "arbitrary" N-tile grid axis: pass 1 accumulates the (C, C) scores in VMEM
    #   scratch, pass 2 re-walks N computing P @ V_tile into (C, TN) output tiles
    #   (and try pl.Buffered(3) on the x BlockSpec on v5e if DMA is exposed).
    # Exactly PyTorch's `output.permute(0, 2, 1).reshape(B, C, H, W)` applied to the
    # (B, C, N) kernel output (raw reshape of the transposed tensor).
    return jnp.transpose(out_cn, (0, 2, 1)).reshape(B, C, H, W)


def _reference(x, wq, wk, wv):
    """Pure-JAX reference mirroring the PyTorch forward."""
    B, C, H, W = x.shape
    N = H * W
    x_flat = jnp.transpose(x.reshape(B, C, N), (0, 2, 1))                  # (B, N, C)
    Q = x_flat @ wq.T
    K = x_flat @ wk.T
    V = x_flat @ wv.T
    A = jnp.einsum("bni,bnj->bij", Q, K) / math.sqrt(C)                    # (B, C, C)
    A = jax.nn.softmax(A, axis=-1)
    out_bnc = jnp.einsum("bij,bnj->bni", A, V)                             # (B, N, C)
    return out_bnc.reshape(B, C, H, W)


if __name__ == "__main__":
    B, C, H, W = 2, 4, 16, 16

    key = jax.random.PRNGKey(0)
    kx, kq, kk, kv = jax.random.split(key, 4)

    x = jax.random.normal(kx, (B, C, H, W), dtype=jnp.float32)

    # nn.Linear default init: U(-1/sqrt(in_features), 1/sqrt(in_features)), shape (out, in)
    bound = 1.0 / math.sqrt(C)
    wq = jax.random.uniform(kq, (C, C), jnp.float32, -bound, bound)
    wk = jax.random.uniform(kk, (C, C), jnp.float32, -bound, bound)
    wv = jax.random.uniform(kv, (C, C), jnp.float32, -bound, bound)

    ref = _reference(x, wq, wk, wv)

    # Default config: block_b = B (grid=1), biggest block per step.
    out = jax.block_until_ready(single_head_self_attention(x, wq, wk, wv))
    assert out.shape == (B, C, H, W)
    assert jnp.allclose(out, ref, atol=1e-5, rtol=1e-5), "default-config mismatch vs reference"

    # Multi-step "parallel" grid path (block_b=1, grid=2) — the v7x megacore-friendly shape.
    out_b1 = jax.block_until_ready(
        single_head_self_attention(x, wq, wk, wv, block_b=1))
    assert out_b1.shape == (B, C, H, W)
    assert jnp.allclose(out_b1, ref, atol=1e-5, rtol=1e-5), "block_b=1 mismatch vs reference"

    print("KERNEL_OK")
</pallas_src>

<mosaic_0001>
module attributes {stable_mosaic.version = 11 : i64} {
  func.func @_attn_kernel(%arg0: i32, %arg1: memref<2x4x256xf32, #tpu.memory_space<vmem>>, %arg2: memref<24x4xf32, #tpu.memory_space<vmem>>, %arg3: memref<2x4x256xf32, #tpu.memory_space<vmem>>) attributes {dimension_semantics = [#tpu.dimension_semantics<parallel>], iteration_bounds = array<i64: 1>, scalar_prefetch = 0 : i64, scratch_operands = 0 : i64, tpu.core_type = #tpu.core_type<tc>, window_params = [{transform_indices = @transform_0, window_bounds = array<i64: 2, 4, 256>}, {pipeline_mode = #tpu.pipeline_mode<synchronous>, transform_indices = @transform_1, window_bounds = array<i64: 24, 4>}, {transform_indices = @transform_2, window_bounds = array<i64: 2, 4, 256>}]} {
    %c0 = arith.constant 0 : index
    %c0_0 = arith.constant 0 : index
    %0 = vector.load %arg2[%c0, %c0_0] : memref<24x4xf32, #tpu.memory_space<vmem>>, vector<24x4xf32>
    %c0_i32 = arith.constant 0 : i32
    %1 = arith.index_cast %c0_i32 : i32 to index
    %c0_1 = arith.constant 0 : index
    %c0_2 = arith.constant 0 : index
    %2 = vector.load %arg1[%1, %c0_1, %c0_2] : memref<2x4x256xf32, #tpu.memory_space<vmem>>, vector<1x4x256xf32>
    %3 = vector.shape_cast %2 : vector<1x4x256xf32> to vector<4x256xf32>
    %cst = arith.constant dense<0.000000e+00> : vector<24x256xf32>
    %4 = tpu.matmul %0, %3, %cst {dimension_numbers = #tpu.dot_dimension_numbers<[1], [0], [0], [1], [0, 0, 1, 1], [], []>} : vector<24x4xf32>, vector<4x256xf32>, vector<24x256xf32> -> vector<24x256xf32>
    %5 = vector.extract_strided_slice %4 {offsets = [0, 0], sizes = [8, 256], strides = [1, 1]} : vector<24x256xf32> to vector<8x256xf32>
    %6 = vector.extract_strided_slice %4 {offsets = [8, 0], sizes = [8, 256], strides = [1, 1]} : vector<24x256xf32> to vector<8x256xf32>
    %7 = vector.extract_strided_slice %4 {offsets = [16, 0], sizes = [8, 256], strides = [1, 1]} : vector<24x256xf32> to vector<8x256xf32>
    %cst_3 = arith.constant dense<0.000000e+00> : vector<8x8xf32>
    %8 = tpu.matmul %5, %6, %cst_3 {dimension_numbers = #tpu.dot_dimension_numbers<[1], [1], [0], [0], [0, 0, 1, 0], [], []>} : vector<8x256xf32>, vector<8x256xf32>, vector<8x8xf32> -> vector<8x8xf32>
    %9 = tpu.iota {dimensions = array<i32: 1>} : vector<8x8xi32>
    %c4_i32 = arith.constant 4 : i32
    %10 = vector.broadcast %c4_i32 : i32 to vector<8x8xi32>
    %11 = arith.cmpi slt, %9, %10 : vector<8x8xi32>
    %cst_4 = arith.constant -1.000000e+30 : f32
    %12 = vector.broadcast %cst_4 : f32 to vector<8x8xf32>
    %13 = arith.select %11, %8, %12 : vector<8x8xi1>, vector<8x8xf32>
    %cst_5 = arith.constant dense<0xFF800000> : vector<8xf32>
    %14 = vector.multi_reduction <maximumf>, %13, %cst_5 [1] : vector<8x8xf32> to vector<8xf32>
    %15 = vector.shape_cast %14 : vector<8xf32> to vector<8x1xf32>
    %16 = vector.broadcast %15 : vector<8x1xf32> to vector<8x8xf32>
    %17 = arith.subf %13, %16 : vector<8x8xf32>
    %18 = math.exp %17 : vector<8x8xf32>
    %cst_6 = arith.constant dense<0.000000e+00> : vector<8xf32>
    %19 = vector.multi_reduction <add>, %18, %cst_6 [1] : vector<8x8xf32> to vector<8xf32>
    %20 = vector.shape_cast %19 : vector<8xf32> to vector<8x1xf32>
    %cst_7 = arith.constant dense<0.000000e+00> : vector<8x256xf32>
    %21 = tpu.matmul %18, %7, %cst_7 {dimension_numbers = #tpu.dot_dimension_numbers<[1], [0], [0], [1], [0, 0, 1, 1], [], []>} : vector<8x8xf32>, vector<8x256xf32>, vector<8x256xf32> -> vector<8x256xf32>
    %22 = tpu.reciprocal %20 {approx = true} : vector<8x1xf32> -> vector<8x1xf32>
    %23 = arith.mulf %20, %22 : vector<8x1xf32>
    %cst_8 = arith.constant 2.000000e+00 : f32
    %24 = vector.broadcast %cst_8 : f32 to vector<8x1xf32>
    %25 = arith.subf %24, %23 : vector<8x1xf32>
    %26 = arith.mulf %22, %25 : vector<8x1xf32>
    %27 = vector.broadcast %26 : vector<8x1xf32> to vector<8x256xf32>
    %28 = arith.mulf %21, %27 : vector<8x256xf32>
    %29 = vector.extract_strided_slice %28 {offsets = [0, 0], sizes = [4, 256], strides = [1, 1]} : vector<8x256xf32> to vector<4x256xf32>
    %30 = arith.index_cast %c0_i32 : i32 to index
    %c0_9 = arith.constant 0 : index
    %c0_10 = arith.constant 0 : index
    %31 = vector.load %arg3[%30, %c0_9, %c0_10] : memref<2x4x256xf32, #tpu.memory_space<vmem>>, vector<1x4x256xf32>
    %32 = vector.shape_cast %31 : vector<1x4x256xf32> to vector<4x256xf32>
    %33 = vector.shape_cast %29 : vector<4x256xf32> to vector<1x4x256xf32>
    tpu.vector_store %arg3[%30, %c0_9, %c0_10], %33 {strides = array<i32>} : memref<2x4x256xf32, #tpu.memory_space<vmem>>, vector<1x4x256xf32>,
    %c1_i32 = arith.constant 1 : i32
    %34 = arith.index_cast %c1_i32 : i32 to index
    %c0_11 = arith.constant 0 : index
    %c0_12 = arith.constant 0 : index
    %35 = vector.load %arg1[%34, %c0_11, %c0_12] : memref<2x4x256xf32, #tpu.memory_space<vmem>>, vector<1x4x256xf32>
    %36 = vector.shape_cast %35 : vector<1x4x256xf32> to vector<4x256xf32>
    %cst_13 = arith.constant dense<0.000000e+00> : vector<24x256xf32>
    %37 = tpu.matmul %0, %36, %cst_13 {dimension_numbers = #tpu.dot_dimension_numbers<[1], [0], [0], [1], [0, 0, 1, 1], [], []>} : vector<24x4xf32>, vector<4x256xf32>, vector<24x256xf32> -> vector<24x256xf32>
    %38 = vector.extract_strided_slice %37 {offsets = [0, 0], sizes = [8, 256], strides = [1, 1]} : vector<24x256xf32> to vector<8x256xf32>
    %39 = vector.extract_strided_slice %37 {offsets = [8, 0], sizes = [8, 256], strides = [1, 1]} : vector<24x256xf32> to vector<8x256xf32>
    %40 = vector.extract_strided_slice %37 {offsets = [16, 0], sizes = [8, 256], strides = [1, 1]} : vector<24x256xf32> to vector<8x256xf32>
    %cst_14 = arith.constant dense<0.000000e+00> : vector<8x8xf32>
    %41 = tpu.matmul %38, %39, %cst_14 {dimension_numbers = #tpu.dot_dimension_numbers<[1], [1], [0], [0], [0, 0, 1, 0], [], []>} : vector<8x256xf32>, vector<8x256xf32>, vector<8x8xf32> -> vector<8x8xf32>
    %42 = tpu.iota {dimensions = array<i32: 1>} : vector<8x8xi32>
    %c4_i32_15 = arith.constant 4 : i32
    %43 = vector.broadcast %c4_i32_15 : i32 to vector<8x8xi32>
    %44 = arith.cmpi slt, %42, %43 : vector<8x8xi32>
    %cst_16 = arith.constant -1.000000e+30 : f32
    %45 = vector.broadcast %cst_16 : f32 to vector<8x8xf32>
    %46 = arith.select %44, %41, %45 : vector<8x8xi1>, vector<8x8xf32>
    %cst_17 = arith.constant dense<0xFF800000> : vector<8xf32>
    %47 = vector.multi_reduction <maximumf>, %46, %cst_17 [1] : vector<8x8xf32> to vector<8xf32>
    %48 = vector.shape_cast %47 : vector<8xf32> to vector<8x1xf32>
    %49 = vector.broadcast %48 : vector<8x1xf32> to vector<8x8xf32>
    %50 = arith.subf %46, %49 : vector<8x8xf32>
    %51 = math.exp %50 : vector<8x8xf32>
    %cst_18 = arith.constant dense<0.000000e+00> : vector<8xf32>
    %52 = vector.multi_reduction <add>, %51, %cst_18 [1] : vector<8x8xf32> to vector<8xf32>
    %53 = vector.shape_cast %52 : vector<8xf32> to vector<8x1xf32>
    %cst_19 = arith.constant dense<0.000000e+00> : vector<8x256xf32>
    %54 = tpu.matmul %51, %40, %cst_19 {dimension_numbers = #tpu.dot_dimension_numbers<[1], [0], [0], [1], [0, 0, 1, 1], [], []>} : vector<8x8xf32>, vector<8x256xf32>, vector<8x256xf32> -> vector<8x256xf32>
    %55 = tpu.reciprocal %53 {approx = true} : vector<8x1xf32> -> vector<8x1xf32>
    %56 = arith.mulf %53, %55 : vector<8x1xf32>
    %cst_20 = arith.constant 2.000000e+00 : f32
    %57 = vector.broadcast %cst_20 : f32 to vector<8x1xf32>
    %58 = arith.subf %57, %56 : vector<8x1xf32>
    %59 = arith.mulf %55, %58 : vector<8x1xf32>
    %60 = vector.broadcast %59 : vector<8x1xf32> to vector<8x256xf32>
    %61 = arith.mulf %54, %60 : vector<8x256xf32>
    %62 = vector.extract_strided_slice %61 {offsets = [0, 0], sizes = [4, 256], strides = [1, 1]} : vector<8x256xf32> to vector<4x256xf32>
    %63 = arith.index_cast %c1_i32 : i32 to index
    %c0_21 = arith.constant 0 : index
    %c0_22 = arith.constant 0 : index
    %64 = vector.load %arg3[%63, %c0_21, %c0_22] : memref<2x4x256xf32, #tpu.memory_space<vmem>>, vector<1x4x256xf32>
    %65 = vector.shape_cast %64 : vector<1x4x256xf32> to vector<4x256xf32>
    %66 = vector.shape_cast %62 : vector<4x256xf32> to vector<1x4x256xf32>
    tpu.vector_store %arg3[%63, %c0_21, %c0_22], %66 {strides = array<i32>} : memref<2x4x256xf32, #tpu.memory_space<vmem>>, vector<1x4x256xf32>,
    %c2_i32 = arith.constant 2 : i32
    return
  }
  func.func @transform_0(%arg0: i32) -> (i32, i32, i32) {
    %c0_i32 = arith.constant 0 : i32
    %c0_i32_0 = arith.constant 0 : i32
    %c0_i32_1 = arith.constant 0 : i32
    return %arg0, %c0_i32, %c0_i32_0 : i32, i32, i32
  }
  func.func @transform_1(%arg0: i32) -> (i32, i32) {
    %c0_i32 = arith.constant 0 : i32
    %c0_i32_0 = arith.constant 0 : i32
    %c0_i32_1 = arith.constant 0 : i32
    return %c0_i32, %c0_i32_0 : i32, i32
  }
  func.func @transform_2(%arg0: i32) -> (i32, i32, i32) {
    %c0_i32 = arith.constant 0 : i32
    %c0_i32_0 = arith.constant 0 : i32
    %c0_i32_1 = arith.constant 0 : i32
    return %arg0, %c0_i32, %c0_i32_0 : i32, i32, i32
  }
}

</mosaic_0001>

<llo_original>
// kernel: tpu_custom_call.1
$region0: #{tpu_custom_call.1}
  #allocation0 [shape = 'u32[]', space=smem, size = 0x4, offset = 0x4, fixed_abs, tag = 'smem constant byte address 0x4 - core index']
  #allocation1 [shape = 'u32[144,128]{1,0:T(1,128)}', space=vmem, size = 0x12000, scoped, tag = 'internal scratch']
  %s0 = inlined_call_operand.vmem [shape: f32[2,4,256], index: 0, kind: input, shape index: {}]
  %s1 = inlined_call_operand.vmem [shape: f32[24,4], index: 1, kind: input, shape index: {}]
  %s2 = inlined_call_operand.hbm [shape: f32[2,4,256], index: 2, kind: output, shape index: {}]
  %s3 = sld [smem:[#allocation0]]
  $region18: #{tpu_custom_call.1} parent=0
    _
  %s5 = ssub.s32 1, %s3
  %s6 = scalar_select 0, %s5, %s3
  $region1: #{tpu_custom_call.1} parent=0
    #allocation2 [shape = 'u8[8192]{0}', space=vmem, size = 0x2000, scoped, tag = 'output window, operand 0, single buffered']
    #allocation3 [shape = 's32[1]{0}', space=sflag, size = 0x4, scoped, tag = 'scoped memory for tpu_custom_call.1']
    %7 = vsyncpa [#allocation3], 0
    // Predicated region
    $region2: #{tpu_custom_call.1} parent=1 // pred_check
      _
    $region3: #{tpu_custom_call.1} parent=1 // pred_check_branch
      %9 = sbr.rel (0) target = $region5
    $region4: #{tpu_custom_call.1} parent=1 // pred_region
      _
    $region5: #{tpu_custom_call.1} parent=1 // pred_fallthru
      _
    // Predicated region
    $region6: #{tpu_custom_call.1} parent=1 // pred_check
      _
    $region7: #{tpu_custom_call.1} parent=1 // pred_check_branch
      %11 = sbr.rel (0) target = $region9
    $region8: #{tpu_custom_call.1} parent=1 // pred_region
      _
    $region9: #{tpu_custom_call.1} parent=1 // pred_fallthru
      _
    %v12 = vld [vmem:[%s1] sm:$0xff]
    %v13 = vld [vmem:[%s1 + $0x8] sm:$0xff]
    %v14 = vld [vmem:[%s1 + $0x10] sm:$0xff]
    %v15 = vld [vmem:[%s0] sm:$0xff]
    %v17 = vcombine.high %v15, %v15
    %vm18 = vcmask 31744
    %v20 = vsel %vm18, %v12, 0
    %v23 = vsel %vm18, %v13, 0
    %v26 = vsel %vm18, %v14, 0
    %vm28 = vcmask 1043456
    %v29 = vsel %vm28, %v15, 0
    %v31 = vsel %vm28, %v17, 0
    %33 = vmatprep.subr.mxu0 %v31
    %34 = vmatpush1.msra.mxu0 %v29
    %35 = vmatprep.subr.mxu0 0.0
    %36 = vmatpush1.msra.mxu0 0.0
    %37 = vmatprep.subr.mxu0 0.0
    %38 = vmatpush1.msra.mxu0 0.0
    %39 = vmatprep.subr.mxu0 0.0
    %40 = vmatpush1.msra.mxu0 0.0
    %41 = vmatprep.subr.mxu0 0.0
    %42 = vmatpush1.msra.mxu0 0.0
    %43 = vmatprep.subr.mxu0 0.0
    %44 = vmatpush1.msra.mxu0 0.0
    %45 = vmatprep.subr.mxu0 0.0
    %46 = vmatpush1.msra.mxu0 0.0
    %47 = vmatprep.subr.mxu0 0.0
    %48 = vmatpush1.msra.mxu0 0.0
    %49 = vmatprep.subr.mxu0 0.0
    %50 = vmatpush1.msra.mxu0 0.0
    %51 = vmatprep.subr.mxu0 0.0
    %52 = vmatpush1.msra.mxu0 0.0
    %53 = vmatprep.subr.mxu0 0.0
    %54 = vmatpush1.msra.mxu0 0.0
    %55 = vmatprep.subr.mxu0 0.0
    %56 = vmatpush1.msra.mxu0 0.0
    %57 = vmatprep.subr.mxu0 0.0
    %58 = vmatpush1.msra.mxu0 0.0
    %59 = vmatprep.subr.mxu0 0.0
    %60 = vmatpush1.msra.mxu0 0.0
    %61 = vmatprep.subr.mxu0 0.0
    %62 = vmatpush1.msra.mxu0 0.0
    %63 = vmatprep.subr.mxu0 0.0
    %64 = vmatpush1.msra.mxu0 0.0
    %65 = vmatprep.subr.mxu0 0.0
    %66 = vmatpush1.msra.mxu0 0.0
    %67 = vmatprep.subr.mxu0 0.0
    %68 = vmatpush1.msra.mxu0 0.0
    %69 = vmatprep.subr.mxu0 0.0
    %70 = vmatpush1.msra.mxu0 0.0
    %71 = vmatprep.subr.mxu0 0.0
    %72 = vmatpush1.msra.mxu0 0.0
    %73 = vmatprep.subr.mxu0 0.0
    %74 = vmatpush1.msra.mxu0 0.0
    %75 = vmatprep.subr.mxu0 0.0
    %76 = vmatpush1.msra.mxu0 0.0
    %77 = vmatprep.subr.mxu0 0.0
    %78 = vmatpush1.msra.mxu0 0.0
    %79 = vmatprep.subr.mxu0 0.0
    %80 = vmatpush1.msra.mxu0 0.0
    %81 = vmatprep.subr.mxu0 0.0
    %82 = vmatpush1.msra.mxu0 0.0
    %83 = vmatprep.subr.mxu0 0.0
    %84 = vmatpush1.msra.mxu0 0.0
    %85 = vmatprep.subr.mxu0 0.0
    %86 = vmatpush1.msra.mxu0 0.0
    %87 = vmatprep.subr.mxu0 0.0
    %88 = vmatpush1.msra.mxu0 0.0
    %89 = vmatprep.subr.mxu0 0.0
    %90 = vmatpush1.msra.mxu0 0.0
    %91 = vmatprep.subr.mxu0 0.0
    %92 = vmatpush1.msra.mxu0 0.0
    %93 = vmatprep.subr.mxu0 0.0
    %94 = vmatpush1.msra.mxu0 0.0
    %95 = vmatprep.subr.mxu0 0.0
    %96 = vmatpush1.msra.mxu0 0.0
    %97 = vmatprep.mubr.f32.mxu0 0.0
    %98 = vmatmul.mubr.f32.gmra.mrb[0].mxu0 %v20
    %v99 = vpop.f32.mrb[0].mxu0
    %v100 = vadd.f32 0.0, %v99
    %v101 = vpop.f32.mrb[0].mxu0
    %v102 = vadd.f32 0.0, %v101
    %103 = vmatprep.mubr.f32.mxu0 0.0
    %104 = vmatmul.mubr.f32.gmra.mrb[0].mxu0 %v23
    %v105 = vpop.f32.mrb[0].mxu0
    %v106 = vadd.f32 0.0, %v105
    %v107 = vpop.f32.mrb[0].mxu0
    %v108 = vadd.f32 0.0, %v107
    %109 = vmatprep.mubr.f32.mxu0 0.0
    %110 = vmatmul.mubr.f32.gmra.mrb[0].mxu0 %v26
    %v111 = vpop.f32.mrb[0].mxu0
    %v112 = vadd.f32 0.0, %v111
    %v113 = vpop.f32.mrb[0].mxu0
    %v114 = vadd.f32 0.0, %v113
    %115 = vdwg.mxu0
    %116 = vmatprep.subr.mxu0 %v108
    %117 = vmatpush1.xpose.msra.mxu0 %v106
    %118 = vmatprep.subr.mxu0 0.0
    %119 = vmatpush1.xpose.msra.mxu0 0.0
    %120 = vmatprep.subr.mxu0 0.0
    %121 = vmatpush1.xpose.msra.mxu0 0.0
    %122 = vmatprep.subr.mxu0 0.0
    %123 = vmatpush1.xpose.msra.mxu0 0.0
    %124 = vmatprep.subr.mxu0 0.0
    %125 = vmatpush1.xpose.msra.mxu0 0.0
    %126 = vmatprep.subr.mxu0 0.0
    %127 = vmatpush1.xpose.msra.mxu0 0.0
    %128 = vmatprep.subr.mxu0 0.0
    %129 = vmatpush1.xpose.msra.mxu0 0.0
    %130 = vmatprep.subr.mxu0 0.0
    %131 = vmatpush1.xpose.msra.mxu0 0.0
    %132 = vmatprep.subr.mxu0 0.0
    %133 = vmatpush1.xpose.msra.mxu0 0.0
    %134 = vmatprep.subr.mxu0 0.0
    %135 = vmatpush1.xpose.msra.mxu0 0.0
    %136 = vmatprep.subr.mxu0 0.0
    %137 = vmatpush1.xpose.msra.mxu0 0.0
    %138 = vmatprep.subr.mxu0 0.0
    %139 = vmatpush1.xpose.msra.mxu0 0.0
    %140 = vmatprep.subr.mxu0 0.0
    %141 = vmatpush1.xpose.msra.mxu0 0.0
    %142 = vmatprep.subr.mxu0 0.0
    %143 = vmatpush1.xpose.msra.mxu0 0.0
    %144 = vmatprep.subr.mxu0 0.0
    %145 = vmatpush1.xpose.msra.mxu0 0.0
    %146 = vmatprep.subr.mxu0 0.0
    %147 = vmatpush1.xpose.msra.mxu0 0.0
    %148 = vmatprep.subr.mxu0 0.0
    %149 = vmatpush1.xpose.msra.mxu0 0.0
    %150 = vmatprep.subr.mxu0 0.0
    %151 = vmatpush1.xpose.msra.mxu0 0.0
    %152 = vmatprep.subr.mxu0 0.0
    %153 = vmatpush1.xpose.msra.mxu0 0.0
    %154 = vmatprep.subr.mxu0 0.0
    %155 = vmatpush1.xpose.msra.mxu0 0.0
    %156 = vmatprep.subr.mxu0 0.0
    %157 = vmatpush1.xpose.msra.mxu0 0.0
    %158 = vmatprep.subr.mxu0 0.0
    %159 = vmatpush1.xpose.msra.mxu0 0.0
    %160 = vmatprep.subr.mxu0 0.0
    %161 = vmatpush1.xpose.msra.mxu0 0.0
    %162 = vmatprep.subr.mxu0 0.0
    %163 = vmatpush1.xpose.msra.mxu0 0.0
    %164 = vmatprep.subr.mxu0 0.0
    %165 = vmatpush1.xpose.msra.mxu0 0.0
    %166 = vmatprep.subr.mxu0 0.0
    %167 = vmatpush1.xpose.msra.mxu0 0.0
    %168 = vmatprep.subr.mxu0 0.0
    %169 = vmatpush1.xpose.msra.mxu0 0.0
    %170 = vmatprep.subr.mxu0 0.0
    %171 = vmatpush1.xpose.msra.mxu0 0.0
    %172 = vmatprep.subr.mxu0 0.0
    %173 = vmatpush1.xpose.msra.mxu0 0.0
    %174 = vmatprep.subr.mxu0 0.0
    %175 = vmatpush1.xpose.msra.mxu0 0.0
    %176 = vmatprep.subr.mxu0 0.0
    %177 = vmatpush1.xpose.msra.mxu0 0.0
    %178 = vmatprep.subr.mxu0 0.0
    %179 = vmatpush1.xpose.msra.mxu0 0.0
    %180 = vmatprep.mubr.f32.mxu0 %v102
    %181 = vmatmul.mubr.f32.gmra.mrb[0].mxu0 %v100
    %v182 = vpop.f32.mrb[0].mxu0
    %v183 = vadd.f32 0.0, %v182
    %v184 = vpop.f32.mrb[0].mxu0
    %185 = vdwg.mxu0
    %v186 = vlaneseq
    %v187 = vand.u32 %v186, 127
    %vm188 = vcmp.lt.s32.totalorder %v187, 4
    %v189 = vsel %vm188, %v183, -1e+30
    %vm190 = vcmask 64512
    %v191 = vsel %vm190, %v189, -inf
    %192 = vmax.xlane.f32.xlu0 %v191
    %v193 = vpop.xlane.xlu0 %192
    %v194 = vsub.f32 %v189, %v193
    %v195 = vmul.f32 %v194, 1.442695
    %v196 = vpow.pop %v195
    %v197 = vsel %vm190, %v196, 0.0
    %198 = vadd.xlane.f32.xlu0 %v197
    %v199 = vpop.xlane.xlu0 %198
    %v201 = vsel %vm190, %v196, 0
    %203 = vmatprep.subr.mxu0 %v114
    %204 = vmatpush1.msra.mxu0 %v112
    %205 = vmatprep.subr.mxu0 0.0
    %206 = vmatpush1.msra.mxu0 0.0
    %207 = vmatprep.subr.mxu0 0.0
    %208 = vmatpush1.msra.mxu0 0.0
    %209 = vmatprep.subr.mxu0 0.0
    %210 = vmatpush1.msra.mxu0 0.0
    %211 = vmatprep.subr.mxu0 0.0
    %212 = vmatpush1.msra.mxu0 0.0
    %213 = vmatprep.subr.mxu0 0.0
    %214 = vmatpush1.msra.mxu0 0.0
    %215 = vmatprep.subr.mxu0 0.0
    %216 = vmatpush1.msra.mxu0 0.0
    %217 = vmatprep.subr.mxu0 0.0
    %218 = vmatpush1.msra.mxu0 0.0
    %219 = vmatprep.subr.mxu0 0.0
    %220 = vmatpush1.msra.mxu0 0.0
    %221 = vmatprep.subr.mxu0 0.0
    %222 = vmatpush1.msra.mxu0 0.0
    %223 = vmatprep.subr.mxu0 0.0
    %224 = vmatpush1.msra.mxu0 0.0
    %225 = vmatprep.subr.mxu0 0.0
    %226 = vmatpush1.msra.mxu0 0.0
    %227 = vmatprep.subr.mxu0 0.0
    %228 = vmatpush1.msra.mxu0 0.0
    %229 = vmatprep.subr.mxu0 0.0
    %230 = vmatpush1.msra.mxu0 0.0
    %231 = vmatprep.subr.mxu0 0.0
    %232 = vmatpush1.msra.mxu0 0.0
    %233 = vmatprep.subr.mxu0 0.0
    %234 = vmatpush1.msra.mxu0 0.0
    %235 = vmatprep.subr.mxu0 0.0
    %236 = vmatpush1.msra.mxu0 0.0
    %237 = vmatprep.subr.mxu0 0.0
    %238 = vmatpush1.msra.mxu0 0.0
    %239 = vmatprep.subr.mxu0 0.0
    %240 = vmatpush1.msra.mxu0 0.0
    %241 = vmatprep.subr.mxu0 0.0
    %242 = vmatpush1.msra.mxu0 0.0
    %243 = vmatprep.subr.mxu0 0.0
    %244 = vmatpush1.msra.mxu0 0.0
    %245 = vmatprep.subr.mxu0 0.0
    %246 = vmatpush1.msra.mxu0 0.0
    %247 = vmatprep.subr.mxu0 0.0
    %248 = vmatpush1.msra.mxu0 0.0
    %249 = vmatprep.subr.mxu0 0.0
    %250 = vmatpush1.msra.mxu0 0.0
    %251 = vmatprep.subr.mxu0 0.0
    %252 = vmatpush1.msra.mxu0 0.0
    %253 = vmatprep.subr.mxu0 0.0
    %254 = vmatpush1.msra.mxu0 0.0
    %255 = vmatprep.subr.mxu0 0.0
    %256 = vmatpush1.msra.mxu0 0.0
    %257 = vmatprep.subr.mxu0 0.0
    %258 = vmatpush1.msra.mxu0 0.0
    %259 = vmatprep.subr.mxu0 0.0
    %260 = vmatpush1.msra.mxu0 0.0
    %261 = vmatprep.subr.mxu0 0.0
    %262 = vmatpush1.msra.mxu0 0.0
    %263 = vmatprep.subr.mxu0 0.0
    %264 = vmatpush1.msra.mxu0 0.0
    %265 = vmatprep.subr.mxu0 0.0
    %266 = vmatpush1.msra.mxu0 0.0
    %267 = vmatprep.mubr.f32.mxu0 0.0
    %268 = vmatmul.mubr.f32.gmra.mrb[0].mxu0 %v201
    %v269 = vpop.f32.mrb[0].mxu0
    %v270 = vadd.f32 0.0, %v269
    %v271 = vpop.f32.mrb[0].mxu0
    %v272 = vadd.f32 0.0, %v271
    %273 = vdwg.mxu0
    %v274 = vrcp.pop %v199
    %v275 = vmul.f32 %v199, %v274
    %v276 = vsub.f32 2.0, %v275
    %v277 = vmul.f32 %v274, %v276
    %v278 = vmul.f32 %v270, %v277
    %v279 = vmul.f32 %v272, %v277
    %v282 = vcombine.low %v278, %v279
    %284 = vst [vmem:[#allocation2] sm:$0xff] %v282
    %s285 = scalar_lea.vmem %s0, 8
    %v286 = vld [vmem:[%s285] sm:$0xff]
    %v288 = vcombine.high %v286, %v286
    %v289 = vsel %vm28, %v286, 0
    %v291 = vsel %vm28, %v288, 0
    %293 = vmatprep.subr.mxu0 %v291
    %294 = vmatpush1.msra.mxu0 %v289
    %295 = vmatprep.subr.mxu0 0.0
    %296 = vmatpush1.msra.mxu0 0.0
    %297 = vmatprep.subr.mxu0 0.0
    %298 = vmatpush1.msra.mxu0 0.0
    %299 = vmatprep.subr.mxu0 0.0
    %300 = vmatpush1.msra.mxu0 0.0
    %301 = vmatprep.subr.mxu0 0.0
    %302 = vmatpush1.msra.mxu0 0.0
    %303 = vmatprep.subr.mxu0 0.0
    %304 = vmatpush1.msra.mxu0 0.0
    %305 = vmatprep.subr.mxu0 0.0
    %306 = vmatpush1.msra.mxu0 0.0
    %307 = vmatprep.subr.mxu0 0.0
    %308 = vmatpush1.msra.mxu0 0.0
    %309 = vmatprep.subr.mxu0 0.0
    %310 = vmatpush1.msra.mxu0 0.0
    %311 = vmatprep.subr.mxu0 0.0
    %312 = vmatpush1.msra.mxu0 0.0
    %313 = vmatprep.subr.mxu0 0.0
    %314 = vmatpush1.msra.mxu0 0.0
    %315 = vmatprep.subr.mxu0 0.0
    %316 = vmatpush1.msra.mxu0 0.0
    %317 = vmatprep.subr.mxu0 0.0
    %318 = vmatpush1.msra.mxu0 0.0
    %319 = vmatprep.subr.mxu0 0.0
    %320 = vmatpush1.msra.mxu0 0.0
    %321 = vmatprep.subr.mxu0 0.0
    %322 = vmatpush1.msra.mxu0 0.0
    %323 = vmatprep.subr.mxu0 0.0
    %324 = vmatpush1.msra.mxu0 0.0
    %325 = vmatprep.subr.mxu0 0.0
    %326 = vmatpush1.msra.mxu0 0.0
    %327 = vmatprep.subr.mxu0 0.0
    %328 = vmatpush1.msra.mxu0 0.0
    %329 = vmatprep.subr.mxu0 0.0
    %330 = vmatpush1.msra.mxu0 0.0
    %331 = vmatprep.subr.mxu0 0.0
    %332 = vmatpush1.msra.mxu0 0.0
    %333 = vmatprep.subr.mxu0 0.0
    %334 = vmatpush1.msra.mxu0 0.0
    %335 = vmatprep.subr.mxu0 0.0
    %336 = vmatpush1.msra.mxu0 0.0
    %337 = vmatprep.subr.mxu0 0.0
    %338 = vmatpush1.msra.mxu0 0.0
    %339 = vmatprep.subr.mxu0 0.0
    %340 = vmatpush1.msra.mxu0 0.0
    %341 = vmatprep.subr.mxu0 0.0
    %342 = vmatpush1.msra.mxu0 0.0
    %343 = vmatprep.subr.mxu0 0.0
    %344 = vmatpush1.msra.mxu0 0.0
    %345 = vmatprep.subr.mxu0 0.0
    %346 = vmatpush1.msra.mxu0 0.0
    %347 = vmatprep.subr.mxu0 0.0
    %348 = vmatpush1.msra.mxu0 0.0
    %349 = vmatprep.subr.mxu0 0.0
    %350 = vmatpush1.msra.mxu0 0.0
    %351 = vmatprep.subr.mxu0 0.0
    %352 = vmatpush1.msra.mxu0 0.0
    %353 = vmatprep.subr.mxu0 0.0
    %354 = vmatpush1.msra.mxu0 0.0
    %355 = vmatprep.subr.mxu0 0.0
    %356 = vmatpush1.msra.mxu0 0.0
    %357 = vmatprep.mubr.f32.mxu0 0.0
    %358 = vmatmul.mubr.f32.gmra.mrb[0].mxu0 %v20
    %v359 = vpop.f32.mrb[0].mxu0
    %v360 = vadd.f32 0.0, %v359
    %v361 = vpop.f32.mrb[0].mxu0
    %v362 = vadd.f32 0.0, %v361
    %363 = vmatprep.mubr.f32.mxu0 0.0
    %364 = vmatmul.mubr.f32.gmra.mrb[0].mxu0 %v23
    %v365 = vpop.f32.mrb[0].mxu0
    %v366 = vadd.f32 0.0, %v365
    %v367 = vpop.f32.mrb[0].mxu0
    %v368 = vadd.f32 0.0, %v367
    %369 = vmatprep.mubr.f32.mxu0 0.0
    %370 = vmatmul.mubr.f32.gmra.mrb[0].mxu0 %v26
    %v371 = vpop.f32.mrb[0].mxu0
    %v372 = vadd.f32 0.0, %v371
    %v373 = vpop.f32.mrb[0].mxu0
    %v374 = vadd.f32 0.0, %v373
    %375 = vdwg.mxu0
    %376 = vmatprep.subr.mxu0 %v368
    %377 = vmatpush1.xpose.msra.mxu0 %v366
    %378 = vmatprep.subr.mxu0 0.0
    %379 = vmatpush1.xpose.msra.mxu0 0.0
    %380 = vmatprep.subr.mxu0 0.0
    %381 = vmatpush1.xpose.msra.mxu0 0.0
    %382 = vmatprep.subr.mxu0 0.0
    %383 = vmatpush1.xpose.msra.mxu0 0.0
    %384 = vmatprep.subr.mxu0 0.0
    %385 = vmatpush1.xpose.msra.mxu0 0.0
    %386 = vmatprep.subr.mxu0 0.0
    %387 = vmatpush1.xpose.msra.mxu0 0.0
    %388 = vmatprep.subr.mxu0 0.0
    %389 = vmatpush1.xpose.msra.mxu0 0.0
    %390 = vmatprep.subr.mxu0 0.0
    %391 = vmatpush1.xpose.msra.mxu0 0.0
    %392 = vmatprep.subr.mxu0 0.0
    %393 = vmatpush1.xpose.msra.mxu0 0.0
    %394 = vmatprep.subr.mxu0 0.0
    %395 = vmatpush1.xpose.msra.mxu0 0.0
    %396 = vmatprep.subr.mxu0 0.0
    %397 = vmatpush1.xpose.msra.mxu0 0.0
    %398 = vmatprep.subr.mxu0 0.0
    %399 = vmatpush1.xpose.msra.mxu0 0.0
    %400 = vmatprep.subr.mxu0 0.0
    %401 = vmatpush1.xpose.msra.mxu0 0.0
    %402 = vmatprep.subr.mxu0 0.0
    %403 = vmatpush1.xpose.msra.mxu0 0.0
    %404 = vmatprep.subr.mxu0 0.0
    %405 = vmatpush1.xpose.msra.mxu0 0.0
    %406 = vmatprep.subr.mxu0 0.0
    %407 = vmatpush1.xpose.msra.mxu0 0.0
    %408 = vmatprep.subr.mxu0 0.0
    %409 = vmatpush1.xpose.msra.mxu0 0.0
    %410 = vmatprep.subr.mxu0 0.0
    %411 = vmatpush1.xpose.msra.mxu0 0.0
    %412 = vmatprep.subr.mxu0 0.0
    %413 = vmatpush1.xpose.msra.mxu0 0.0
    %414 = vmatprep.subr.mxu0 0.0
    %415 = vmatpush1.xpose.msra.mxu0 0.0
    %416 = vmatprep.subr.mxu0 0.0
    %417 = vmatpush1.xpose.msra.mxu0 0.0
    %418 = vmatprep.subr.mxu0 0.0
    %419 = vmatpush1.xpose.msra.mxu0 0.0
    %420 = vmatprep.subr.mxu0 0.0
    %421 = vmatpush1.xpose.msra.mxu0 0.0
    %422 = vmatprep.subr.mxu0 0.0
    %423 = vmatpush1.xpose.msra.mxu0 0.0
    %424 = vmatprep.subr.mxu0 0.0
    %425 = vmatpush1.xpose.msra.mxu0 0.0
    %426 = vmatprep.subr.mxu0 0.0
    %427 = vmatpush1.xpose.msra.mxu0 0.0
    %428 = vmatprep.subr.mxu0 0.0
    %429 = vmatpush1.xpose.msra.mxu0 0.0
    %430 = vmatprep.subr.mxu0 0.0
    %431 = vmatpush1.xpose.msra.mxu0 0.0
    %432 = vmatprep.subr.mxu0 0.0
    %433 = vmatpush1.xpose.msra.mxu0 0.0
    %434 = vmatprep.subr.mxu0 0.0
    %435 = vmatpush1.xpose.msra.mxu0 0.0
    %436 = vmatprep.subr.mxu0 0.0
    %437 = vmatpush1.xpose.msra.mxu0 0.0
    %438 = vmatprep.subr.mxu0 0.0
    %439 = vmatpush1.xpose.msra.mxu0 0.0
    %440 = vmatprep.mubr.f32.mxu0 %v362
    %441 = vmatmul.mubr.f32.gmra.mrb[0].mxu0 %v360
    %v442 = vpop.f32.mrb[0].mxu0
    %v443 = vadd.f32 0.0, %v442
    %v444 = vpop.f32.mrb[0].mxu0
    %445 = vdwg.mxu0
    %v446 = vsel %vm188, %v443, -1e+30
    %v447 = vsel %vm190, %v446, -inf
    %448 = vmax.xlane.f32.xlu0 %v447
    %v449 = vpop.xlane.xlu0 %448
    %v450 = vsub.f32 %v446, %v449
    %v451 = vmul.f32 %v450, 1.442695
    %v452 = vpow.pop %v451
    %v453 = vsel %vm190, %v452, 0.0
    %454 = vadd.xlane.f32.xlu0 %v453
    %v455 = vpop.xlane.xlu0 %454
    %v457 = vsel %vm190, %v452, 0
    %459 = vmatprep.subr.mxu0 %v374
    %460 = vmatpush1.msra.mxu0 %v372
    %461 = vmatprep.subr.mxu0 0.0
    %462 = vmatpush1.msra.mxu0 0.0
    %463 = vmatprep.subr.mxu0 0.0
    %464 = vmatpush1.msra.mxu0 0.0
    %465 = vmatprep.subr.mxu0 0.0
    %466 = vmatpush1.msra.mxu0 0.0
    %467 = vmatprep.subr.mxu0 0.0
    %468 = vmatpush1.msra.mxu0 0.0
    %469 = vmatprep.subr.mxu0 0.0
    %470 = vmatpush1.msra.mxu0 0.0
    %471 = vmatprep.subr.mxu0 0.0
    %472 = vmatpush1.msra.mxu0 0.0
    %473 = vmatprep.subr.mxu0 0.0
    %474 = vmatpush1.msra.mxu0 0.0
    %475 = vmatprep.subr.mxu0 0.0
    %476 = vmatpush1.msra.mxu0 0.0
    %477 = vmatprep.subr.mxu0 0.0
    %478 = vmatpush1.msra.mxu0 0.0
    %479 = vmatprep.subr.mxu0 0.0
    %480 = vmatpush1.msra.mxu0 0.0
    %481 = vmatprep.subr.mxu0 0.0
    %482 = vmatpush1.msra.mxu0 0.0
    %483 = vmatprep.subr.mxu0 0.0
    %484 = vmatpush1.msra.mxu0 0.0
    %485 = vmatprep.subr.mxu0 0.0
    %486 = vmatpush1.msra.mxu0 0.0
    %487 = vmatprep.subr.mxu0 0.0
    %488 = vmatpush1.msra.mxu0 0.0
    %489 = vmatprep.subr.mxu0 0.0
    %490 = vmatpush1.msra.mxu0 0.0
    %491 = vmatprep.subr.mxu0 0.0
    %492 = vmatpush1.msra.mxu0 0.0
    %493 = vmatprep.subr.mxu0 0.0
    %494 = vmatpush1.msra.mxu0 0.0
    %495 = vmatprep.subr.mxu0 0.0
    %496 = vmatpush1.msra.mxu0 0.0
    %497 = vmatprep.subr.mxu0 0.0
    %498 = vmatpush1.msra.mxu0 0.0
    %499 = vmatprep.subr.mxu0 0.0
    %500 = vmatpush1.msra.mxu0 0.0
    %501 = vmatprep.subr.mxu0 0.0
    %502 = vmatpush1.msra.mxu0 0.0
    %503 = vmatprep.subr.mxu0 0.0
    %504 = vmatpush1.msra.mxu0 0.0
    %505 = vmatprep.subr.mxu0 0.0
    %506 = vmatpush1.msra.mxu0 0.0
    %507 = vmatprep.subr.mxu0 0.0
    %508 = vmatpush1.msra.mxu0 0.0
    %509 = vmatprep.subr.mxu0 0.0
    %510 = vmatpush1.msra.mxu0 0.0
    %511 = vmatprep.subr.mxu0 0.0
    %512 = vmatpush1.msra.mxu0 0.0
    %513 = vmatprep.subr.mxu0 0.0
    %514 = vmatpush1.msra.mxu0 0.0
    %515 = vmatprep.subr.mxu0 0.0
    %516 = vmatpush1.msra.mxu0 0.0
    %517 = vmatprep.subr.mxu0 0.0
    %518 = vmatpush1.msra.mxu0 0.0
    %519 = vmatprep.subr.mxu0 0.0
    %520 = vmatpush1.msra.mxu0 0.0
    %521 = vmatprep.subr.mxu0 0.0
    %522 = vmatpush1.msra.mxu0 0.0
    %523 = vmatprep.mubr.f32.mxu0 0.0
    %524 = vmatmul.mubr.f32.gmra.mrb[0].mxu0 %v457
    %v525 = vpop.f32.mrb[0].mxu0
    %v526 = vadd.f32 0.0, %v525
    %v527 = vpop.f32.mrb[0].mxu0
    %v528 = vadd.f32 0.0, %v527
    %529 = vdwg.mxu0
    %v530 = vrcp.pop %v455
    %v531 = vmul.f32 %v455, %v530
    %v532 = vsub.f32 2.0, %v531
    %v533 = vmul.f32 %v530, %v532
    %v534 = vmul.f32 %v526, %v533
    %v535 = vmul.f32 %v528, %v533
    %v538 = vcombine.low %v534, %v535
    %s540 = scalar_lea.vmem [#allocation2], 8
    %541 = vst [vmem:[%s540] sm:$0xff] %v538
    // Predicated region
    $region10: #{tpu_custom_call.1} parent=1 // pred_check
      _
    $region11: #{tpu_custom_call.1} parent=1 // pred_check_branch
      %543 = sbr.rel (0) target = $region13
    $region12: #{tpu_custom_call.1} parent=1 // pred_region
      %s545 = ssub.s32 256, 256
      %546 = vsyncadd [#allocation3], %s545
      %s547 = sshll.u32 [#allocation2], 4
      %s548 = int_to_ptr.vmem [resolvable:$true] %s547
      %553 = dma.vmem_to_hbm [thread:$0]  %s548, 256, %s2, [#allocation3], 128, 128, 8
    $region13: #{tpu_custom_call.1} parent=1 // pred_fallthru
      _
    // Predicated region
    $region14: #{tpu_custom_call.1} parent=1 // pred_check
      _
    $region15: #{tpu_custom_call.1} parent=1 // pred_check_branch
      %555 = sbr.rel (0) target = $region17
    $region16: #{tpu_custom_call.1} parent=1 // pred_region
      %556 = dma.done [#allocation3], 256
    $region17: #{tpu_custom_call.1} parent=1 // pred_fallthru
      _
    %557 = vsyncpa [#allocation3], 1

</llo_original>
